<compile_context>
chip_gen: v7x
topology: tpu7x:2x2x1
jax: 0.10.0
libtpu: 0.0.40
codegen_flags: <defaults>
</compile_context>

<pallas_src>
import functools
from typing import NamedTuple, Optional

import jax
import jax.numpy as jnp
from jax.experimental import pallas as pl
from jax.experimental.pallas import tpu as pltpu

_LANE = 128
_SUBLANE = 8
_NEG_INF = -1e30


def _round_up(n, m):
    return (n + m - 1) // m * m


def _vmem_capacity_bytes():
    # 64 MiB per TensorCore on v7x, 128 MiB on v5e/v6e.
    try:
        return int(pltpu.get_tpu_info().vmem_capacity_bytes)
    except Exception:
        return 128 << 20


class MLP2Params(NamedTuple):
    w1: jax.Array   # (din_p, dh_p)  matmul dtype, zero-padded
    b1: jax.Array   # (1, dh_p)      f32, zero-padded
    w2: jax.Array   # (dh_p, do_p)   matmul dtype, zero-padded
    b2: jax.Array   # (1, do_p)      f32, padded lanes = -1e30


def prepare_params(w1, b1, w2, b2, matmul_dtype=jnp.float32):
    """Pad / cast the weights ONCE (not per forward call).

    Weights are stored as (fan_in, fan_out) == W.T of PyTorch's layout so the
    kernel computes y = x @ W + b.  matmul_dtype=bf16 is the MXU fast path on
    every TPU generation (v5e's MXU is natively bf16 too); the bias add, ReLU
    and log-softmax always run in f32.
    """
    dim_in, dim_hidden = w1.shape
    dim_out = w2.shape[1]
    din_p = _round_up(dim_in, _LANE)
    dh_p = _round_up(dim_hidden, _LANE)
    do_p = _round_up(dim_out, _LANE)

    w1_p = (jnp.zeros((din_p, dh_p), jnp.float32)
            .at[:dim_in, :dim_hidden].set(w1).astype(matmul_dtype))
    b1_p = jnp.zeros((1, dh_p), jnp.float32).at[:, :dim_hidden].set(b1.reshape(1, -1))
    w2_p = (jnp.zeros((dh_p, do_p), jnp.float32)
            .at[:dim_hidden, :dim_out].set(w2).astype(matmul_dtype))
    # Padded W2 columns are zero, so padded-lane logits equal b2 == -1e30:
    # the log-softmax max / sum(exp) stays exact with no in-kernel mask.
    b2_p = (jnp.full((1, do_p), _NEG_INF, jnp.float32)
            .at[:, :dim_out].set(b2.reshape(1, -1)))
    return MLP2Params(w1_p, b1_p, w2_p, b2_p)


def _make_resident_kernel(matmul_dtype):
    """All weights VMEM-resident; batch streamed over a 1-D grid."""
    def kernel(x_ref, w1_ref, b1_ref, w2_ref, b2_ref, o_ref):
        # layer_input: x @ W1 + b1, ReLU (MXU + VPU); acc / bias / relu in f32.
        h = jnp.dot(x_ref[...], w1_ref[...], preferred_element_type=jnp.float32)
        h = jnp.maximum(h + b1_ref[...], 0.0)
        # layer_hidden: h @ W2 + b2 (padded lanes land exactly at -1e30).
        logits = jnp.dot(h.astype(matmul_dtype), w2_ref[...],
                         preferred_element_type=jnp.float32)
        logits = logits + b2_ref[...]
        # numerically-stable log_softmax over the feature (lane) axis.
        m = jnp.max(logits, axis=-1, keepdims=True)
        shifted = logits - m
        lse = jnp.log(jnp.sum(jnp.exp(shifted), axis=-1, keepdims=True))
        o_ref[...] = (shifted - lse).astype(o_ref.dtype)
    return kernel


def _make_hidden_tiled_kernel(matmul_dtype):
    """Wide-hidden fallback: dim_hidden tiled over an 'arbitrary' grid axis,
    second-matmul partial products accumulated in an f32 VMEM scratch."""
    def kernel(x_ref, w1_ref, b1_ref, w2_ref, b2_ref, o_ref, acc_ref):
        j = pl.program_id(1)

        @pl.when(j == 0)
        def _():
            acc_ref[...] = jnp.zeros_like(acc_ref)

        h = jnp.dot(x_ref[...], w1_ref[...], preferred_element_type=jnp.float32)
        h = jnp.maximum(h + b1_ref[...], 0.0)
        acc_ref[...] += jnp.dot(h.astype(matmul_dtype), w2_ref[...],
                                preferred_element_type=jnp.float32)

        @pl.when(j == pl.num_programs(1) - 1)
        def _():
            logits = acc_ref[...] + b2_ref[...]
            m = jnp.max(logits, axis=-1, keepdims=True)
            shifted = logits - m
            lse = jnp.log(jnp.sum(jnp.exp(shifted), axis=-1, keepdims=True))
            o_ref[...] = (shifted - lse).astype(o_ref.dtype)
    return kernel


@functools.partial(
    jax.jit,
    static_argnames=("dim_out", "block_b", "hidden_block", "force_hidden_tiling"))
def mlp2_forward(x, params: MLP2Params, dim_out: int, *, block_b: int = 1024,
                 hidden_block: Optional[int] = None,
                 force_hidden_tiling: bool = False):
    """Fused MLP2 forward.  x: (B, dim_in) f32; params from prepare_params."""
    B, dim_in = x.shape
    din_p, dh_p = params.w1.shape
    do_p = params.w2.shape[1]
    assert din_p >= dim_in and do_p >= dim_out

    matmul_dtype = params.w1.dtype
    w_itemsize = jnp.dtype(matmul_dtype).itemsize
    stream_bf16 = matmul_dtype == jnp.bfloat16
    x_dtype = jnp.bfloat16 if stream_bf16 else jnp.float32
    x_itemsize = jnp.dtype(x_dtype).itemsize

    # ---- generation-aware VMEM budget (64 MiB v7x, 128 MiB v5e/v6e) ---------
    vmem_cap = _vmem_capacity_bytes()
    vmem_budget = vmem_cap - (12 << 20)       # compiler scratch / spill headroom

    # ---- batch tile: bf16 needs 16-row packing; guarantee >=2 grid steps ----
    row_align = 16 if stream_bf16 else _SUBLANE
    tb = min(_round_up(block_b, row_align), _round_up(B, row_align))
    tb = min(tb, _round_up(-(-B // 2), row_align))   # >=2 steps for v7x megacore

    weight_bytes = ((params.w1.size + params.w2.size) * w_itemsize   # Buffered(1)
                    + (params.b1.size + params.b2.size) * 4)

    def resident_step_bytes(tb_):
        return (2 * tb_ * din_p * x_itemsize       # x (double-buffered)
                + 2 * tb_ * do_p * 4               # out (double-buffered)
                + tb_ * dh_p * (4 + w_itemsize)    # h f32 (+ cast copy)
                + 3 * tb_ * do_p * 4)              # logits / shifted / exp

    use_hidden_tiling = force_hidden_tiling or (
        weight_bytes > int(0.75 * vmem_budget))

    if not use_hidden_tiling:
        # shrink the batch tile until resident weights + working set fit.
        while tb > row_align and weight_bytes + resident_step_bytes(tb) > vmem_budget:
            tb = max(row_align, _round_up(tb // 2, row_align))
        vmem_est = weight_bytes + resident_step_bytes(tb)
        b_p = _round_up(B, tb)
        grid = (b_p // tb,)
        kernel = _make_resident_kernel(matmul_dtype)
        resident = dict(pipeline_mode=pl.Buffered(1))    # DMA'd once, 1 buffer
        in_specs = [
            pl.BlockSpec((tb, din_p), lambda i: (i, 0)),                 # x: streamed
            pl.BlockSpec((din_p, dh_p), lambda i: (0, 0), **resident),   # W1 resident
            pl.BlockSpec((1, dh_p), lambda i: (0, 0), **resident),       # b1 resident
            pl.BlockSpec((dh_p, do_p), lambda i: (0, 0), **resident),    # W2 resident
            pl.BlockSpec((1, do_p), lambda i: (0, 0), **resident),       # b2 resident
        ]
        out_spec = pl.BlockSpec((tb, do_p), lambda i: (i, 0))
        scratch = []
        dim_sem = ("parallel",)
    else:
        def htiled_step_bytes(tb_, th_):
            return (2 * (din_p * th_ + th_ * do_p) * w_itemsize  # W1/W2 tiles, 2x buf
                    + 2 * th_ * 4 + do_p * 4                     # b1 tiles + b2
                    + 2 * tb_ * din_p * x_itemsize               # x (2x buf)
                    + 2 * tb_ * do_p * 4 + tb_ * do_p * 4        # out + f32 accumulator
                    + tb_ * th_ * (4 + w_itemsize)               # h (+ cast copy)
                    + 3 * tb_ * do_p * 4)                        # logits / shifted / exp

        def largest_divisor_tile(limit):
            t = max(_LANE, (min(limit, dh_p) // _LANE) * _LANE)
            while dh_p % t != 0:
                t -= _LANE
            return t

        th = largest_divisor_tile(hidden_block if hidden_block is not None else 512)
        while th > _LANE and htiled_step_bytes(tb, th) > vmem_budget:
            th = largest_divisor_tile(th - _LANE)
        while tb > row_align and htiled_step_bytes(tb, th) > vmem_budget:
            tb = max(row_align, _round_up(tb // 2, row_align))
        vmem_est = htiled_step_bytes(tb, th)
        b_p = _round_up(B, tb)
        grid = (b_p // tb, dh_p // th)
        kernel = _make_hidden_tiled_kernel(matmul_dtype)
        in_specs = [
            pl.BlockSpec((tb, din_p), lambda i, j: (i, 0)),   # x: constant over j
            pl.BlockSpec((din_p, th), lambda i, j: (0, j)),   # W1 column tile
            pl.BlockSpec((1, th), lambda i, j: (0, j)),       # b1 tile
            pl.BlockSpec((th, do_p), lambda i, j: (j, 0)),    # W2 row tile
            pl.BlockSpec((1, do_p), lambda i, j: (0, 0),
                         pipeline_mode=pl.Buffered(1)),       # b2 resident
        ]
        out_spec = pl.BlockSpec((tb, do_p), lambda i, j: (i, 0))
        scratch = [pltpu.VMEM((tb, do_p), jnp.float32)]       # f32 logits accumulator
        dim_sem = ("parallel", "arbitrary")

    # ---- pad / cast x only when actually needed ------------------------------
    if (b_p != B) or (din_p != dim_in) or (x.dtype != x_dtype):
        x_p = (jnp.zeros((b_p, din_p), x_dtype)
               .at[:B, :dim_in].set(x.astype(x_dtype)))
    else:
        x_p = x

    compiler_kwargs = dict(dimension_semantics=dim_sem)
    if vmem_est + (4 << 20) > (32 << 20):     # only raise above the scoped default
        compiler_kwargs["vmem_limit_bytes"] = int(
            min(vmem_est + (8 << 20), vmem_cap - (8 << 20)))

    out_p = pl.pallas_call(
        kernel,
        out_shape=jax.ShapeDtypeStruct((b_p, do_p), jnp.float32),
        grid=grid,
        in_specs=in_specs,
        out_specs=out_spec,
        scratch_shapes=scratch,
        compiler_params=pltpu.CompilerParams(**compiler_kwargs),
    )(x_p, params.w1, params.b1, params.w2, params.b2)

    return out_p[:B, :dim_out]


def init_params(key, dim_in, dim_hidden, dim_out):
    """Deterministic init mimicking nn.Linear's U(-1/sqrt(fan_in), 1/sqrt(fan_in)).
    Weights are stored (fan_in, fan_out) == W.T of PyTorch's (fan_out, fan_in)."""
    k1, k2, k3, k4 = jax.random.split(key, 4)
    bound1 = 1.0 / jnp.sqrt(dim_in)
    bound2 = 1.0 / jnp.sqrt(dim_hidden)
    w1 = jax.random.uniform(k1, (dim_in, dim_hidden), jnp.float32, -bound1, bound1)
    b1 = jax.random.uniform(k2, (dim_hidden,), jnp.float32, -bound1, bound1)
    w2 = jax.random.uniform(k3, (dim_hidden, dim_out), jnp.float32, -bound2, bound2)
    b2 = jax.random.uniform(k4, (dim_out,), jnp.float32, -bound2, bound2)
    return w1, b1, w2, b2


def mlp2_reference(x, w1, b1, w2, b2):
    h = jnp.maximum(x @ w1 + b1, 0.0)
    logits = h @ w2 + b2
    return jax.nn.log_softmax(logits, axis=-1)


if __name__ == "__main__":
    key = jax.random.PRNGKey(0)
    kx, kp, kp2 = jax.random.split(key, 3)

    # Small shapes consistent with the module: (batch, dim_in) -> hidden -> out.
    batch, dim_in, dim_hidden, dim_out = 64, 32, 64, 16
    x = jax.random.normal(kx, (batch, dim_in), jnp.float32)
    w1, b1, w2, b2 = init_params(kp, dim_in, dim_hidden, dim_out)
    ref = mlp2_reference(x, w1, b1, w2, b2)

    # 1) Exact f32 path; batch tile auto-capped so the 1-D grid has >= 2 steps.
    p_f32 = prepare_params(w1, b1, w2, b2, matmul_dtype=jnp.float32)
    out = jax.block_until_ready(mlp2_forward(x, p_f32, dim_out, block_b=512))
    assert out.shape == (batch, dim_out)
    assert jnp.allclose(out, ref, atol=1e-5, rtol=1e-5), "f32 resident path mismatch"

    # 2) bf16 MXU-operand path (fast path on v5e/v6e/v7x): x streamed as bf16.
    p_bf16 = prepare_params(w1, b1, w2, b2, matmul_dtype=jnp.bfloat16)
    out_bf16 = jax.block_until_ready(mlp2_forward(x, p_bf16, dim_out, block_b=512))
    assert jnp.allclose(out_bf16, ref, atol=5e-2, rtol=5e-2), "bf16 path mismatch"

    # 3) Wide-hidden fallback (hidden dim tiled over an 'arbitrary' axis with an
    #    f32 accumulator), forced here at a small shape to exercise that path.
    dh_wide = 256
    w1w, b1w, w2w, b2w = init_params(kp2, dim_in, dh_wide, dim_out)
    ref_w = mlp2_reference(x, w1w, b1w, w2w, b2w)
    p_w = prepare_params(w1w, b1w, w2w, b2w, matmul_dtype=jnp.float32)
    out_w = jax.block_until_ready(
        mlp2_forward(x, p_w, dim_out, block_b=32,
                     hidden_block=128, force_hidden_tiling=True))
    assert jnp.allclose(out_w, ref_w, atol=1e-4, rtol=1e-4), "hidden-tiled mismatch"

    print("KERNEL_OK")
</pallas_src>

<mosaic_0001>
module attributes {stable_mosaic.version = 11 : i64} {
  func.func @kernel(%arg0: i32, %arg1: memref<32x128xf32, #tpu.memory_space<vmem>>, %arg2: memref<128x128xf32, #tpu.memory_space<vmem>>, %arg3: memref<1x128xf32, #tpu.memory_space<vmem>>, %arg4: memref<128x128xf32, #tpu.memory_space<vmem>>, %arg5: memref<1x128xf32, #tpu.memory_space<vmem>>, %arg6: memref<32x128xf32, #tpu.memory_space<vmem>>) attributes {dimension_semantics = [#tpu.dimension_semantics<parallel>], iteration_bounds = array<i64: 2>, scalar_prefetch = 0 : i64, scratch_operands = 0 : i64, tpu.core_type = #tpu.core_type<tc>, window_params = [{transform_indices = @transform_0, window_bounds = array<i64: 32, 128>}, {pipeline_mode = #tpu.pipeline_mode<synchronous>, transform_indices = @transform_1, window_bounds = array<i64: 128, 128>}, {pipeline_mode = #tpu.pipeline_mode<synchronous>, transform_indices = @transform_2, window_bounds = array<i64: 1, 128>}, {pipeline_mode = #tpu.pipeline_mode<synchronous>, transform_indices = @transform_3, window_bounds = array<i64: 128, 128>}, {pipeline_mode = #tpu.pipeline_mode<synchronous>, transform_indices = @transform_4, window_bounds = array<i64: 1, 128>}, {transform_indices = @transform_5, window_bounds = array<i64: 32, 128>}]} {
    %c0 = arith.constant 0 : index
    %c0_0 = arith.constant 0 : index
    %0 = vector.load %arg1[%c0, %c0_0] : memref<32x128xf32, #tpu.memory_space<vmem>>, vector<32x128xf32>
    %c0_1 = arith.constant 0 : index
    %c0_2 = arith.constant 0 : index
    %1 = vector.load %arg2[%c0_1, %c0_2] : memref<128x128xf32, #tpu.memory_space<vmem>>, vector<128x128xf32>
    %cst = arith.constant dense<0.000000e+00> : vector<32x128xf32>
    %2 = tpu.matmul %0, %1, %cst {dimension_numbers = #tpu.dot_dimension_numbers<[1], [0], [0], [1], [0, 0, 1, 1], [], []>} : vector<32x128xf32>, vector<128x128xf32>, vector<32x128xf32> -> vector<32x128xf32>
    %c0_3 = arith.constant 0 : index
    %c0_4 = arith.constant 0 : index
    %3 = vector.load %arg3[%c0_3, %c0_4] : memref<1x128xf32, #tpu.memory_space<vmem>>, vector<1x128xf32>
    %4 = vector.broadcast %3 : vector<1x128xf32> to vector<32x128xf32>
    %5 = arith.addf %2, %4 : vector<32x128xf32>
    %cst_5 = arith.constant 0.000000e+00 : f32
    %6 = vector.broadcast %cst_5 : f32 to vector<32x128xf32>
    %7 = arith.maximumf %5, %6 : vector<32x128xf32>
    %c0_6 = arith.constant 0 : index
    %c0_7 = arith.constant 0 : index
    %8 = vector.load %arg4[%c0_6, %c0_7] : memref<128x128xf32, #tpu.memory_space<vmem>>, vector<128x128xf32>
    %cst_8 = arith.constant dense<0.000000e+00> : vector<32x128xf32>
    %9 = tpu.matmul %7, %8, %cst_8 {dimension_numbers = #tpu.dot_dimension_numbers<[1], [0], [0], [1], [0, 0, 1, 1], [], []>} : vector<32x128xf32>, vector<128x128xf32>, vector<32x128xf32> -> vector<32x128xf32>
    %c0_9 = arith.constant 0 : index
    %c0_10 = arith.constant 0 : index
    %10 = vector.load %arg5[%c0_9, %c0_10] : memref<1x128xf32, #tpu.memory_space<vmem>>, vector<1x128xf32>
    %11 = vector.broadcast %10 : vector<1x128xf32> to vector<32x128xf32>
    %12 = arith.addf %9, %11 : vector<32x128xf32>
    %cst_11 = arith.constant dense<0xFF800000> : vector<32xf32>
    %13 = vector.multi_reduction <maximumf>, %12, %cst_11 [1] : vector<32x128xf32> to vector<32xf32>
    %14 = vector.shape_cast %13 : vector<32xf32> to vector<32x1xf32>
    %15 = vector.broadcast %14 : vector<32x1xf32> to vector<32x128xf32>
    %16 = arith.subf %12, %15 : vector<32x128xf32>
    %17 = math.exp %16 : vector<32x128xf32>
    %cst_12 = arith.constant dense<0.000000e+00> : vector<32xf32>
    %18 = vector.multi_reduction <add>, %17, %cst_12 [1] : vector<32x128xf32> to vector<32xf32>
    %19 = vector.shape_cast %18 : vector<32xf32> to vector<32x1xf32>
    %20 = math.log %19 : vector<32x1xf32>
    %21 = vector.broadcast %20 : vector<32x1xf32> to vector<32x128xf32>
    %22 = arith.subf %16, %21 : vector<32x128xf32>
    %c0_13 = arith.constant 0 : index
    %c0_14 = arith.constant 0 : index
    %23 = vector.load %arg6[%c0_13, %c0_14] : memref<32x128xf32, #tpu.memory_space<vmem>>, vector<32x128xf32>
    tpu.vector_store %arg6[%c0_13, %c0_14], %22 {strides = array<i32>} : memref<32x128xf32, #tpu.memory_space<vmem>>, vector<32x128xf32>,
    return
  }
  func.func @transform_0(%arg0: i32) -> (i32, i32) {
    %c0_i32 = arith.constant 0 : i32
    %c0_i32_0 = arith.constant 0 : i32
    return %arg0, %c0_i32 : i32, i32
  }
  func.func @transform_1(%arg0: i32) -> (i32, i32) {
    %c0_i32 = arith.constant 0 : i32
    %c0_i32_0 = arith.constant 0 : i32
    %c0_i32_1 = arith.constant 0 : i32
    return %c0_i32, %c0_i32_0 : i32, i32
  }
  func.func @transform_2(%arg0: i32) -> (i32, i32) {
    %c0_i32 = arith.constant 0 : i32
    %c0_i32_0 = arith.constant 0 : i32
    %c0_i32_1 = arith.constant 0 : i32
    return %c0_i32, %c0_i32_0 : i32, i32
  }
  func.func @transform_3(%arg0: i32) -> (i32, i32) {
    %c0_i32 = arith.constant 0 : i32
    %c0_i32_0 = arith.constant 0 : i32
    %c0_i32_1 = arith.constant 0 : i32
    return %c0_i32, %c0_i32_0 : i32, i32
  }
  func.func @transform_4(%arg0: i32) -> (i32, i32) {
    %c0_i32 = arith.constant 0 : i32
    %c0_i32_0 = arith.constant 0 : i32
    %c0_i32_1 = arith.constant 0 : i32
    return %c0_i32, %c0_i32_0 : i32, i32
  }
  func.func @transform_5(%arg0: i32) -> (i32, i32) {
    %c0_i32 = arith.constant 0 : i32
    %c0_i32_0 = arith.constant 0 : i32
    return %arg0, %c0_i32 : i32, i32
  }
}

</mosaic_0001>

<llo_original>
// kernel: mlp2_forward.1
$region0: #{mlp2_forward.1}
  #allocation0 [shape = 'u32[]', space=smem, size = 0x4, offset = 0x4, fixed_abs, tag = 'smem constant byte address 0x4 - core index']
  #allocation1 [shape = 'u32[144,128]{1,0:T(1,128)}', space=vmem, size = 0x12000, scoped, tag = 'internal scratch']
  %s0 = inlined_call_operand.vmem [shape: f32[64,128], index: 0, kind: input, shape index: {}]
  %s1 = inlined_call_operand.vmem [shape: f32[128,128], index: 1, kind: input, shape index: {}]
  %s2 = inlined_call_operand.vmem [shape: f32[1,128], index: 2, kind: input, shape index: {}]
  %s3 = inlined_call_operand.vmem [shape: f32[128,128], index: 3, kind: input, shape index: {}]
  %s4 = inlined_call_operand.vmem [shape: f32[1,128], index: 4, kind: input, shape index: {}]
  %s5 = inlined_call_operand.vmem [shape: f32[64,128], index: 5, kind: output, shape index: {}]
  %s6 = sld [smem:[#allocation0]]
  $region53: #{mlp2_forward.1} parent=0
    _
  %s8 = ssub.s32 1, %s6
  %s9 = scalar_select 0, %s8, %s6
  loop: start=0, step=1, limit=4
  $region2: #{mlp2_forward.1} parent=0 // loop_pre_header
    _
  $region3: #{mlp2_forward.1} parent=0 // loop_header
    %s11 = sphi 0, %s15
    %p12 = scmp.ge.s32.totalorder %s11, 4
    %s21 = sphi 0, %s23
    %s24 = sphi 0, %s21
    %s25 = sphi 0, %s24
    %s41 = sphi 0, %s25
    %s45 = sphi 0, %s45
    %s47 = sphi 0, %s45
    %s48 = sphi 0, %s47
    %s62 = sphi 0, %s48
    %s66 = sphi 0, %s66
    %s68 = sphi 0, %s66
    %s69 = sphi 0, %s68
    %s83 = sphi 0, %s69
    %s87 = sphi 0, %s87
    %s89 = sphi 0, %s87
    %s90 = sphi 0, %s89
    %s104 = sphi 0, %s90
    %s108 = sphi 0, %s108
    %s110 = sphi 0, %s108
    %s111 = sphi 0, %s110
    %s125 = sphi 0, %s111
    %s131 = sphi 0, %s133
    %s134 = sphi 0, %s131
    %s135 = sphi 0, %s134
    %s151 = sphi 0, %s135
  $region4: #{mlp2_forward.1} parent=0 // loop_header_branch
    %14 = sbr.rel (%p12) target = $region8
  $region5: #{mlp2_forward.1} parent=0 // loop_body
    %s16 = ssub.s32 %s11, 1
    %s17 = ssub.s32 %s11, 2
    %s18 = sadd.s32 %s11, 1
    %s19 = ssub.s32 %s11, %s18
    %p20 = scmp.eq.s32.totalorder %s19, 0
    %s22 = sadd.s32 %s21, 1
    %s23 = scalar_select %p20, %s21, %s22
    %p26 = pneg %p20
    %p27 = scmp.eq.s32.totalorder %s11, 1
    %p28 = por %p26, %p27
    %p29 = scmp.ne.s32.totalorder %s21, %s24
    %p30 = scmp.eq.s32.totalorder %s11, 0
    %p31 = por %p29, %p30
    %p32 = scmp.ne.s32.totalorder %s21, %s24
    %p33 = scmp.eq.s32.totalorder %s16, 1
    %p34 = por %p32, %p33
    %p35 = scmp.ne.s32.totalorder %s24, %s25
    %p36 = scmp.eq.s32.totalorder %s16, 0
    %p37 = por %p35, %p36
    %p38 = scmp.ne.s32.totalorder %s24, %s25
    %p39 = scmp.eq.s32.totalorder %s17, 1
    %p40 = por %p38, %p39
    %p42 = scmp.ne.s32.totalorder %s25, %s41
    %p43 = scmp.eq.s32.totalorder %s17, 0
    %p44 = por %p42, %p43
    %s46 = sadd.s32 %s45, 1
    %p49 = scmp.eq.s32.totalorder %s11, 1
    %p50 = scmp.ne.s32.totalorder %s45, %s47
    %p51 = scmp.eq.s32.totalorder %s11, 0
    %p52 = por %p50, %p51
    %p53 = scmp.ne.s32.totalorder %s45, %s47
    %p54 = scmp.eq.s32.totalorder %s16, 1
    %p55 = por %p53, %p54
    %p56 = scmp.ne.s32.totalorder %s47, %s48
    %p57 = scmp.eq.s32.totalorder %s16, 0
    %p58 = por %p56, %p57
    %p59 = scmp.ne.s32.totalorder %s47, %s48
    %p60 = scmp.eq.s32.totalorder %s17, 1
    %p61 = por %p59, %p60
    %p63 = scmp.ne.s32.totalorder %s48, %s62
    %p64 = scmp.eq.s32.totalorder %s17, 0
    %p65 = por %p63, %p64
    %s67 = sadd.s32 %s66, 1
    %p70 = scmp.eq.s32.totalorder %s11, 1
    %p71 = scmp.ne.s32.totalorder %s66, %s68
    %p72 = scmp.eq.s32.totalorder %s11, 0
    %p73 = por %p71, %p72
    %p74 = scmp.ne.s32.totalorder %s66, %s68
    %p75 = scmp.eq.s32.totalorder %s16, 1
    %p76 = por %p74, %p75
    %p77 = scmp.ne.s32.totalorder %s68, %s69
    %p78 = scmp.eq.s32.totalorder %s16, 0
    %p79 = por %p77, %p78
    %p80 = scmp.ne.s32.totalorder %s68, %s69
    %p81 = scmp.eq.s32.totalorder %s17, 1
    %p82 = por %p80, %p81
    %p84 = scmp.ne.s32.totalorder %s69, %s83
    %p85 = scmp.eq.s32.totalorder %s17, 0
    %p86 = por %p84, %p85
    %s88 = sadd.s32 %s87, 1
    %p91 = scmp.eq.s32.totalorder %s11, 1
    %p92 = scmp.ne.s32.totalorder %s87, %s89
    %p93 = scmp.eq.s32.totalorder %s11, 0
    %p94 = por %p92, %p93
    %p95 = scmp.ne.s32.totalorder %s87, %s89
    %p96 = scmp.eq.s32.totalorder %s16, 1
    %p97 = por %p95, %p96
    %p98 = scmp.ne.s32.totalorder %s89, %s90
    %p99 = scmp.eq.s32.totalorder %s16, 0
    %p100 = por %p98, %p99
    %p101 = scmp.ne.s32.totalorder %s89, %s90
    %p102 = scmp.eq.s32.totalorder %s17, 1
    %p103 = por %p101, %p102
    %p105 = scmp.ne.s32.totalorder %s90, %s104
    %p106 = scmp.eq.s32.totalorder %s17, 0
    %p107 = por %p105, %p106
    %s109 = sadd.s32 %s108, 1
    %p112 = scmp.eq.s32.totalorder %s11, 1
    %p113 = scmp.ne.s32.totalorder %s108, %s110
    %p114 = scmp.eq.s32.totalorder %s11, 0
    %p115 = por %p113, %p114
    %p116 = scmp.ne.s32.totalorder %s108, %s110
    %p117 = scmp.eq.s32.totalorder %s16, 1
    %p118 = por %p116, %p117
    %p119 = scmp.ne.s32.totalorder %s110, %s111
    %p120 = scmp.eq.s32.totalorder %s16, 0
    %p121 = por %p119, %p120
    %p122 = scmp.ne.s32.totalorder %s110, %s111
    %p123 = scmp.eq.s32.totalorder %s17, 1
    %p124 = por %p122, %p123
    %p126 = scmp.ne.s32.totalorder %s111, %s125
    %p127 = scmp.eq.s32.totalorder %s17, 0
    %p128 = por %p126, %p127
    %s129 = ssub.s32 %s11, %s18
    %p130 = scmp.eq.s32.totalorder %s129, 0
    %s132 = sadd.s32 %s131, 1
    %s133 = scalar_select %p130, %s131, %s132
    %p136 = pneg %p130
    %p137 = scmp.eq.s32.totalorder %s11, 1
    %p138 = por %p136, %p137
    %p139 = scmp.ne.s32.totalorder %s131, %s134
    %p140 = scmp.eq.s32.totalorder %s11, 0
    %p141 = por %p139, %p140
    %p142 = scmp.ne.s32.totalorder %s131, %s134
    %p143 = scmp.eq.s32.totalorder %s16, 1
    %p144 = por %p142, %p143
    %p145 = scmp.ne.s32.totalorder %s134, %s135
    %p146 = scmp.eq.s32.totalorder %s16, 0
    %p147 = por %p145, %p146
    %p148 = scmp.ne.s32.totalorder %s134, %s135
    %p149 = scmp.eq.s32.totalorder %s17, 1
    %p150 = por %p148, %p149
    %p152 = scmp.ne.s32.totalorder %s135, %s151
    %p153 = scmp.eq.s32.totalorder %s17, 0
    %p154 = por %p152, %p153
    %p155 = scmp.le.s32.totalorder 1, %s11
    %p156 = scmp.lt.s32.totalorder %s11, 3
    %p157 = pnand %p155, %p156
    %p158 = pneg %p157
    // Predicated region
    $region9: #{mlp2_forward.1} parent=5 // pred_check
      _
    $region10: #{mlp2_forward.1} parent=5 // pred_check_branch
      %160 = sbr.rel (%p157) target = $region12
    $region11: #{mlp2_forward.1} parent=5 // pred_region
      %s161 = ssub.s32 %s11, 1
      // Predicated region
      $region13: #{mlp2_forward.1} parent=11 // pred_check
        %p162 = pneg %p58
      $region14: #{mlp2_forward.1} parent=11 // pred_check_branch
        %164 = sbr.rel (%p162) target = $region16
      $region15: #{mlp2_forward.1} parent=11 // pred_region
        _
      $region16: #{mlp2_forward.1} parent=11 // pred_fallthru
        _
      // Predicated region
      $region17: #{mlp2_forward.1} parent=11 // pred_check
        %p165 = pneg %p79
      $region18: #{mlp2_forward.1} parent=11 // pred_check_branch
        %167 = sbr.rel (%p165) target = $region20
      $region19: #{mlp2_forward.1} parent=11 // pred_region
        _
      $region20: #{mlp2_forward.1} parent=11 // pred_fallthru
        _
      // Predicated region
      $region21: #{mlp2_forward.1} parent=11 // pred_check
        %p168 = pneg %p100
      $region22: #{mlp2_forward.1} parent=11 // pred_check_branch
        %170 = sbr.rel (%p168) target = $region24
      $region23: #{mlp2_forward.1} parent=11 // pred_region
        _
      $region24: #{mlp2_forward.1} parent=11 // pred_fallthru
        _
      // Predicated region
      $region25: #{mlp2_forward.1} parent=11 // pred_check
        %p171 = pneg %p121
      $region26: #{mlp2_forward.1} parent=11 // pred_check_branch
        %173 = sbr.rel (%p171) target = $region28
      $region27: #{mlp2_forward.1} parent=11 // pred_region
        _
      $region28: #{mlp2_forward.1} parent=11 // pred_fallthru
        _
    $region12: #{mlp2_forward.1} parent=5 // pred_fallthru
      _
    %p174 = scmp.lt.s32.totalorder %s11, 2
    // Predicated region
    $region29: #{mlp2_forward.1} parent=5 // pred_check
      %p175 = pneg %p174
    $region30: #{mlp2_forward.1} parent=5 // pred_check_branch
      %177 = sbr.rel (%p175) target = $region32
    $region31: #{mlp2_forward.1} parent=5 // pred_region
      // Predicated region
      $region33: #{mlp2_forward.1} parent=31 // pred_check
        %p178 = pneg %p31
      $region34: #{mlp2_forward.1} parent=31 // pred_check_branch
        %180 = sbr.rel (%p178) target = $region36
      $region35: #{mlp2_forward.1} parent=31 // pred_region
        %s181 = smul.u32 4, %s11
        %p182 = scmp.lt.s32.totalorder %s181, 7
        %s183 = scalar_select %p182, %s181, 7
        %s184 = smul.addr %s183, 8
        %s185 = scalar_lea.vmem %s0, %s184
        %s186 = smul.u32 4, %s11
      $region36: #{mlp2_forward.1} parent=31 // pred_fallthru
        _
    $region32: #{mlp2_forward.1} parent=5 // pred_fallthru
      _
    %p187 = scmp.le.s32.totalorder 1, %s11
    %p188 = scmp.lt.s32.totalorder %s11, 3
    %p189 = pnand %p187, %p188
    %p190 = pneg %p189
    // Predicated region
    $region37: #{mlp2_forward.1} parent=5 // pred_check
      _
    $region38: #{mlp2_forward.1} parent=5 // pred_check_branch
      %192 = sbr.rel (%p189) target = $region40
    $region39: #{mlp2_forward.1} parent=5 // pred_region
      %s193 = ssub.s32 %s11, 1
      %s194 = smul.u32 4, %s16
      %p195 = scmp.lt.s32.totalorder %s194, 7
      %s196 = scalar_select %p195, %s194, 7
      %s197 = smul.addr %s196, 8
      %s198 = scalar_lea.vmem %s0, %s197
      %p199 = pneg %p37
      %p200 = pneg %p34
      %p201 = pneg %p58
      %p202 = pneg %p55
      %p203 = pneg %p79
      %p204 = pneg %p76
      %p205 = pneg %p100
      %p206 = pneg %p97
      %p207 = pneg %p121
      %p208 = pneg %p118
      %p209 = pneg %p147
      %p210 = pneg %p144
      %s211 = smul.u32 4, %s16
      %p212 = scmp.lt.s32.totalorder %s211, 7
      %s213 = scalar_select %p212, %s211, 7
      %s214 = smul.addr %s213, 8
      %s215 = scalar_lea.vmem %s5, %s214
      %s216 = smul.u32 4, %s16
      %p217 = scmp.lt.s32.totalorder %s216, 7
      %s218 = scalar_select %p217, %s216, 7
      %s219 = smul.addr %s218, 8
      %s220 = scalar_lea.vmem %s0, %s219
      %s221 = smul.u32 4, %s16
      %s222 = smul.u32 4, %s16
      %p223 = scmp.lt.s32.totalorder %s222, 7
      %s224 = scalar_select %p223, %s222, 7
      %s225 = smul.addr %s224, 8
      %s226 = scalar_lea.vmem %s5, %s225
      %s227 = smul.u32 4, %s16
      %v228 = vld [vmem:[%s220] sm:$0xff]
      %v229 = vld [vmem:[%s220 + $0x8] sm:$0xff]
      %v230 = vld [vmem:[%s220 + $0x10] sm:$0xff]
      %v231 = vld [vmem:[%s220 + $0x18] sm:$0xff]
      %v232 = vld [vmem:[%s1] sm:$0xff]
      %v233 = vld [vmem:[%s1 + $0x8] sm:$0xff]
      %v234 = vld [vmem:[%s1 + $0x10] sm:$0xff]
      %v235 = vld [vmem:[%s1 + $0x18] sm:$0xff]
      %v236 = vld [vmem:[%s1 + $0x20] sm:$0xff]
      %v237 = vld [vmem:[%s1 + $0x28] sm:$0xff]
      %v238 = vld [vmem:[%s1 + $0x30] sm:$0xff]
      %v239 = vld [vmem:[%s1 + $0x38] sm:$0xff]
      %v240 = vld [vmem:[%s1 + $0x40] sm:$0xff]
      %v241 = vld [vmem:[%s1 + $0x48] sm:$0xff]
      %v242 = vld [vmem:[%s1 + $0x50] sm:$0xff]
      %v243 = vld [vmem:[%s1 + $0x58] sm:$0xff]
      %v244 = vld [vmem:[%s1 + $0x60] sm:$0xff]
      %v245 = vld [vmem:[%s1 + $0x68] sm:$0xff]
      %v246 = vld [vmem:[%s1 + $0x70] sm:$0xff]
      %v247 = vld [vmem:[%s1 + $0x78] sm:$0xff]
      %v248 = vld [vmem:[%s2] sm:$0x1]
      %v250 = vlaneseq
      %v251 = vshrl.u32 %v250, 7
      %v252 = vsub.s32 0, %v251
      %v253 = vrot.slane %v248, %v252
      %255 = vmatprep.subr.mxu0 0.0
      %256 = vmatpush1.msra.mxu0 %v232
      %257 = vmatprep.subr.mxu0 0.0
      %258 = vmatpush1.msra.mxu0 %v233
      %259 = vmatprep.subr.mxu0 0.0
      %260 = vmatpush1.msra.mxu0 %v234
      %261 = vmatprep.subr.mxu0 0.0
      %262 = vmatpush1.msra.mxu0 %v235
      %263 = vmatprep.subr.mxu0 0.0
      %264 = vmatpush1.msra.mxu0 %v236
      %265 = vmatprep.subr.mxu0 0.0
      %266 = vmatpush1.msra.mxu0 %v237
      %267 = vmatprep.subr.mxu0 0.0
      %268 = vmatpush1.msra.mxu0 %v238
      %269 = vmatprep.subr.mxu0 0.0
      %270 = vmatpush1.msra.mxu0 %v239
      %271 = vmatprep.subr.mxu0 0.0
      %272 = vmatpush1.msra.mxu0 %v240
      %273 = vmatprep.subr.mxu0 0.0
      %274 = vmatpush1.msra.mxu0 %v241
      %275 = vmatprep.subr.mxu0 0.0
      %276 = vmatpush1.msra.mxu0 %v242
      %277 = vmatprep.subr.mxu0 0.0
      %278 = vmatpush1.msra.mxu0 %v243
      %279 = vmatprep.subr.mxu0 0.0
      %280 = vmatpush1.msra.mxu0 %v244
      %281 = vmatprep.subr.mxu0 0.0
      %282 = vmatpush1.msra.mxu0 %v245
      %283 = vmatprep.subr.mxu0 0.0
      %284 = vmatpush1.msra.mxu0 %v246
      %285 = vmatprep.subr.mxu0 0.0
      %286 = vmatpush1.msra.mxu0 %v247
      %287 = vmatprep.subr.mxu0 0.0
      %288 = vmatpush1.msra.mxu0 0.0
      %289 = vmatprep.subr.mxu0 0.0
      %290 = vmatpush1.msra.mxu0 0.0
      %291 = vmatprep.subr.mxu0 0.0
      %292 = vmatpush1.msra.mxu0 0.0
      %293 = vmatprep.subr.mxu0 0.0
      %294 = vmatpush1.msra.mxu0 0.0
      %295 = vmatprep.subr.mxu0 0.0
      %296 = vmatpush1.msra.mxu0 0.0
      %297 = vmatprep.subr.mxu0 0.0
      %298 = vmatpush1.msra.mxu0 0.0
      %299 = vmatprep.subr.mxu0 0.0
      %300 = vmatpush1.msra.mxu0 0.0
      %301 = vmatprep.subr.mxu0 0.0
      %302 = vmatpush1.msra.mxu0 0.0
      %303 = vmatprep.subr.mxu0 0.0
      %304 = vmatpush1.msra.mxu0 0.0
      %305 = vmatprep.subr.mxu0 0.0
      %306 = vmatpush1.msra.mxu0 0.0
      %307 = vmatprep.subr.mxu0 0.0
      %308 = vmatpush1.msra.mxu0 0.0
      %309 = vmatprep.subr.mxu0 0.0
      %310 = vmatpush1.msra.mxu0 0.0
      %311 = vmatprep.subr.mxu0 0.0
      %312 = vmatpush1.msra.mxu0 0.0
      %313 = vmatprep.subr.mxu0 0.0
      %314 = vmatpush1.msra.mxu0 0.0
      %315 = vmatprep.subr.mxu0 0.0
      %316 = vmatpush1.msra.mxu0 0.0
      %317 = vmatprep.subr.mxu0 0.0
      %318 = vmatpush1.msra.mxu0 0.0
      %319 = vmatprep.mubr.f32.mxu0 0.0
      %320 = vmatmul.mubr.f32.gmra.mrb[0].mxu0 %v228
      %v321 = vpop.f32.mrb[0].mxu0
      %v322 = vadd.f32 %v253, %v321
      %v323 = vpop.f32.mrb[0].mxu0
      %324 = vmatprep.mubr.f32.mxu0 0.0
      %325 = vmatmul.mubr.f32.gmra.mrb[0].mxu0 %v229
      %v326 = vpop.f32.mrb[0].mxu0
      %v327 = vadd.f32 %v253, %v326
      %v328 = vpop.f32.mrb[0].mxu0
      %329 = vmatprep.mubr.f32.mxu0 0.0
      %330 = vmatmul.mubr.f32.gmra.mrb[0].mxu0 %v230
      %v331 = vpop.f32.mrb[0].mxu0
      %v332 = vadd.f32 %v253, %v331
      %v333 = vpop.f32.mrb[0].mxu0
      %334 = vmatprep.mubr.f32.mxu0 0.0
      %335 = vmatmul.mubr.f32.gmra.mrb[0].mxu0 %v231
      %v336 = vpop.f32.mrb[0].mxu0
      %v337 = vadd.f32 %v253, %v336
      %v338 = vpop.f32.mrb[0].mxu0
      %339 = vdwg.mxu0
      %v340 = vmax.f32 %v322, 0.0
      %v341 = vmax.f32 %v327, 0.0
      %v342 = vmax.f32 %v332, 0.0
      %v343 = vmax.f32 %v337, 0.0
      %v344 = vld [vmem:[%s3] sm:$0xff]
      %v345 = vld [vmem:[%s3 + $0x8] sm:$0xff]
      %v346 = vld [vmem:[%s3 + $0x10] sm:$0xff]
      %v347 = vld [vmem:[%s3 + $0x18] sm:$0xff]
      %v348 = vld [vmem:[%s3 + $0x20] sm:$0xff]
      %v349 = vld [vmem:[%s3 + $0x28] sm:$0xff]
      %v350 = vld [vmem:[%s3 + $0x30] sm:$0xff]
      %v351 = vld [vmem:[%s3 + $0x38] sm:$0xff]
      %v352 = vld [vmem:[%s3 + $0x40] sm:$0xff]
      %v353 = vld [vmem:[%s3 + $0x48] sm:$0xff]
      %v354 = vld [vmem:[%s3 + $0x50] sm:$0xff]
      %v355 = vld [vmem:[%s3 + $0x58] sm:$0xff]
      %v356 = vld [vmem:[%s3 + $0x60] sm:$0xff]
      %v357 = vld [vmem:[%s3 + $0x68] sm:$0xff]
      %v358 = vld [vmem:[%s3 + $0x70] sm:$0xff]
      %v359 = vld [vmem:[%s3 + $0x78] sm:$0xff]
      %v360 = vld [vmem:[%s4] sm:$0x1]
      %v362 = vlaneseq
      %v363 = vshrl.u32 %v362, 7
      %v364 = vsub.s32 0, %v363
      %v365 = vrot.slane %v360, %v364
      %367 = vmatprep.subr.mxu0 0.0
      %368 = vmatpush1.msra.mxu0 %v344
      %369 = vmatprep.subr.mxu0 0.0
      %370 = vmatpush1.msra.mxu0 %v345
      %371 = vmatprep.subr.mxu0 0.0
      %372 = vmatpush1.msra.mxu0 %v346
      %373 = vmatprep.subr.mxu0 0.0
      %374 = vmatpush1.msra.mxu0 %v347
      %375 = vmatprep.subr.mxu0 0.0
      %376 = vmatpush1.msra.mxu0 %v348
      %377 = vmatprep.subr.mxu0 0.0
      %378 = vmatpush1.msra.mxu0 %v349
      %379 = vmatprep.subr.mxu0 0.0
      %380 = vmatpush1.msra.mxu0 %v350
      %381 = vmatprep.subr.mxu0 0.0
      %382 = vmatpush1.msra.mxu0 %v351
      %383 = vmatprep.subr.mxu0 0.0
      %384 = vmatpush1.msra.mxu0 %v352
      %385 = vmatprep.subr.mxu0 0.0
      %386 = vmatpush1.msra.mxu0 %v353
      %387 = vmatprep.subr.mxu0 0.0
      %388 = vmatpush1.msra.mxu0 %v354
      %389 = vmatprep.subr.mxu0 0.0
      %390 = vmatpush1.msra.mxu0 %v355
      %391 = vmatprep.subr.mxu0 0.0
      %392 = vmatpush1.msra.mxu0 %v356
      %393 = vmatprep.subr.mxu0 0.0
      %394 = vmatpush1.msra.mxu0 %v357
      %395 = vmatprep.subr.mxu0 0.0
      %396 = vmatpush1.msra.mxu0 %v358
      %397 = vmatprep.subr.mxu0 0.0
      %398 = vmatpush1.msra.mxu0 %v359
      %399 = vmatprep.subr.mxu0 0.0
      %400 = vmatpush1.msra.mxu0 0.0
      %401 = vmatprep.subr.mxu0 0.0
      %402 = vmatpush1.msra.mxu0 0.0
      %403 = vmatprep.subr.mxu0 0.0
      %404 = vmatpush1.msra.mxu0 0.0
      %405 = vmatprep.subr.mxu0 0.0
      %406 = vmatpush1.msra.mxu0 0.0
      %407 = vmatprep.subr.mxu0 0.0
      %408 = vmatpush1.msra.mxu0 0.0
      %409 = vmatprep.subr.mxu0 0.0
      %410 = vmatpush1.msra.mxu0 0.0
      %411 = vmatprep.subr.mxu0 0.0
      %412 = vmatpush1.msra.mxu0 0.0
      %413 = vmatprep.subr.mxu0 0.0
      %414 = vmatpush1.msra.mxu0 0.0
      %415 = vmatprep.subr.mxu0 0.0
      %416 = vmatpush1.msra.mxu0 0.0
      %417 = vmatprep.subr.mxu0 0.0
      %418 = vmatpush1.msra.mxu0 0.0
      %419 = vmatprep.subr.mxu0 0.0
      %420 = vmatpush1.msra.mxu0 0.0
      %421 = vmatprep.subr.mxu0 0.0
      %422 = vmatpush1.msra.mxu0 0.0
      %423 = vmatprep.subr.mxu0 0.0
      %424 = vmatpush1.msra.mxu0 0.0
      %425 = vmatprep.subr.mxu0 0.0
      %426 = vmatpush1.msra.mxu0 0.0
      %427 = vmatprep.subr.mxu0 0.0
      %428 = vmatpush1.msra.mxu0 0.0
      %429 = vmatprep.subr.mxu0 0.0
      %430 = vmatpush1.msra.mxu0 0.0
      %431 = vmatprep.mubr.f32.mxu0 0.0
      %432 = vmatmul.mubr.f32.gmra.mrb[0].mxu0 %v340
      %v433 = vpop.f32.mrb[0].mxu0
      %v434 = vadd.f32 %v365, %v433
      %v435 = vpop.f32.mrb[0].mxu0
      %436 = vmatprep.mubr.f32.mxu0 0.0
      %437 = vmatmul.mubr.f32.gmra.mrb[0].mxu0 %v341
      %v438 = vpop.f32.mrb[0].mxu0
      %v439 = vadd.f32 %v365, %v438
      %v440 = vpop.f32.mrb[0].mxu0
      %441 = vmatprep.mubr.f32.mxu0 0.0
      %442 = vmatmul.mubr.f32.gmra.mrb[0].mxu0 %v342
      %v443 = vpop.f32.mrb[0].mxu0
      %v444 = vadd.f32 %v365, %v443
      %v445 = vpop.f32.mrb[0].mxu0
      %446 = vmatprep.mubr.f32.mxu0 0.0
      %447 = vmatmul.mubr.f32.gmra.mrb[0].mxu0 %v343
      %v448 = vpop.f32.mrb[0].mxu0
      %v449 = vadd.f32 %v365, %v448
      %v450 = vpop.f32.mrb[0].mxu0
      %451 = vdwg.mxu0
      %452 = vmax.xlane.f32.xlu0 %v434
      %v453 = vpop.xlane.xlu0 %452
      %454 = vmax.xlane.f32.xlu0 %v439
      %v455 = vpop.xlane.xlu0 %454
      %456 = vmax.xlane.f32.xlu0 %v444
      %v457 = vpop.xlane.xlu0 %456
      %458 = vmax.xlane.f32.xlu0 %v449
      %v459 = vpop.xlane.xlu0 %458
      %v460 = vsub.f32 %v434, %v453
      %v461 = vsub.f32 %v439, %v455
      %v462 = vsub.f32 %v444, %v457
      %v463 = vsub.f32 %v449, %v459
      %v464 = vmul.f32 %v460, 1.442695
      %v465 = vpow.pop %v464
      %v466 = vmul.f32 %v461, 1.442695
      %v467 = vpow.pop %v466
      %v468 = vmul.f32 %v462, 1.442695
      %v469 = vpow.pop %v468
      %v470 = vmul.f32 %v463, 1.442695
      %v471 = vpow.pop %v470
      %472 = vadd.xlane.f32.xlu0 %v465
      %v473 = vpop.xlane.xlu0 %472
      %474 = vadd.xlane.f32.xlu0 %v467
      %v475 = vpop.xlane.xlu0 %474
      %476 = vadd.xlane.f32.xlu0 %v469
      %v477 = vpop.xlane.xlu0 %476
      %478 = vadd.xlane.f32.xlu0 %v471
      %v479 = vpop.xlane.xlu0 %478
      %v480 = vlog2.pop %v473
      %v481 = vmul.f32 %v480, 0.6931472
      %v482 = vlog2.pop %v475
      %v483 = vmul.f32 %v482, 0.6931472
      %v484 = vlog2.pop %v477
      %v485 = vmul.f32 %v484, 0.6931472
      %v486 = vlog2.pop %v479
      %v487 = vmul.f32 %v486, 0.6931472
      %v488 = vsub.f32 %v460, %v481
      %v489 = vsub.f32 %v461, %v483
      %v490 = vsub.f32 %v462, %v485
      %v491 = vsub.f32 %v463, %v487
      %492 = vst [vmem:[%s226] sm:$0xff] %v488
      %493 = vst [vmem:[%s226 + $0x8] sm:$0xff] %v489
      %494 = vst [vmem:[%s226 + $0x10] sm:$0xff] %v490
      %495 = vst [vmem:[%s226 + $0x18] sm:$0xff] %v491
      %s496 = smul.u32 4, %s16
      %p497 = scmp.lt.s32.totalorder %s496, 7
      %s498 = scalar_select %p497, %s496, 7
      %s499 = smul.addr %s498, 8
      %s500 = scalar_lea.vmem %s5, %s499
      // Predicated region
      $region41: #{mlp2_forward.1} parent=39 // pred_check
        %p501 = pneg %p144
      $region42: #{mlp2_forward.1} parent=39 // pred_check_branch
        %503 = sbr.rel (%p501) target = $region44
      $region43: #{mlp2_forward.1} parent=39 // pred_region
        %s504 = smul.u32 4, %s16
      $region44: #{mlp2_forward.1} parent=39 // pred_fallthru
        _
    $region40: #{mlp2_forward.1} parent=5 // pred_fallthru
      _
    %p505 = scmp.le.s32.totalorder 2, %s11
    // Predicated region
    $region45: #{mlp2_forward.1} parent=5 // pred_check
      %p506 = pneg %p505
    $region46: #{mlp2_forward.1} parent=5 // pred_check_branch
      %508 = sbr.rel (%p506) target = $region48
    $region47: #{mlp2_forward.1} parent=5 // pred_region
      %s509 = ssub.s32 %s11, 2
      // Predicated region
      $region49: #{mlp2_forward.1} parent=47 // pred_check
        %p510 = pneg %p150
      $region50: #{mlp2_forward.1} parent=47 // pred_check_branch
        %512 = sbr.rel (%p510) target = $region52
      $region51: #{mlp2_forward.1} parent=47 // pred_region
        %s513 = smul.u32 4, %s17
        %p514 = scmp.lt.s32.totalorder %s513, 7
        %s515 = scalar_select %p514, %s513, 7
        %s516 = smul.addr %s515, 8
        %s517 = scalar_lea.vmem %s5, %s516
      $region52: #{mlp2_forward.1} parent=47 // pred_fallthru
        _
    $region48: #{mlp2_forward.1} parent=5 // pred_fallthru
      _
  $region6: #{mlp2_forward.1} parent=0 // loop_footer
    %s15 = sadd.s32 1, %s11
  $region7: #{mlp2_forward.1} parent=0 // loop_footer_branch
    %10 = sbr.rel target = $region3
  $region8: #{mlp2_forward.1} parent=0 // loop_exit
    _

</llo_original>
